<compile_context>
chip_gen: v7x
topology: tpu7x:2x2x1
jax: 0.10.0
libtpu: 0.0.40
codegen_flags: <defaults>
</compile_context>

<pallas_src>
import jax
import jax.numpy as jnp
from jax import lax
from jax.experimental import pallas as pl
from jax.experimental.pallas import tpu as pltpu


def _round_up(x, m):
    return (x + m - 1) // m * m


# ----------------------------- Pallas kernel --------------------------------

def _make_two_mlp_head_kernel(mc, n_chunks, has_clinical):
    """relu(relu(x @ W6 + b6) @ W7 + b7) for one (tm, .) ROI tile.

    The tile is processed in `n_chunks` row chunks of `mc` rows so that, once
    unrolled, fc7 of chunk j can be scheduled against fc6 of chunk j+1.
    """

    def chunk_body(j, refs):
        if has_clinical:
            xi_ref, xc_ref, w6i_ref, w6c_ref, b6_ref, w7_ref, b7_ref, out_ref = refs
        else:
            xi_ref, w6i_ref, b6_ref, w7_ref, b7_ref, out_ref = refs
            xc_ref = w6c_ref = None
        r0 = j * mc if isinstance(j, int) else pl.multiple_of(j * mc, mc)

        # fc6: bf16 MXU matmuls with f32 accumulation; bias-add + ReLU in f32.
        xi = xi_ref[pl.ds(r0, mc), :].astype(jnp.bfloat16)
        h = jnp.dot(xi, w6i_ref[...], preferred_element_type=jnp.float32)
        if has_clinical:
            xc = xc_ref[pl.ds(r0, mc), :].astype(jnp.bfloat16)
            h = h + jnp.dot(xc, w6c_ref[...], preferred_element_type=jnp.float32)
        h = jnp.maximum(h + b6_ref[...], 0.0).astype(jnp.bfloat16)

        # fc7
        y = jnp.dot(h, w7_ref[...], preferred_element_type=jnp.float32)
        y = jnp.maximum(y + b7_ref[...], 0.0)
        out_ref[pl.ds(r0, mc), :] = y.astype(out_ref.dtype)

    def kernel(*refs):
        if n_chunks == 1:
            chunk_body(0, refs)
        else:
            def loop_body(j, carry):
                chunk_body(j, refs)
                return carry
            lax.fori_loop(0, n_chunks, loop_body, 0, unroll=True)

    return kernel


def _resident_spec(shape):
    """Constant-index (VMEM-resident) operand; single-buffered when supported."""
    try:
        return pl.BlockSpec(shape, lambda i: (0, 0), pipeline_mode=pl.Buffered(1))
    except TypeError:  # older BlockSpec signature: fall back to default buffering
        return pl.BlockSpec(shape, lambda i: (0, 0))


def _plan_tiles(n, f_img, f_clin, r, resident_bytes, out_bytes, block_m, vmem_cap):
    """Pick the ROI tile (tm) and in-tile chunk (mc) under the VMEM budget."""
    n = max(n, 1)
    # >= 2 grid steps when N allows (v7x megacore), rows a multiple of 16 for
    # bf16 stores, but never taller than the (8-rounded) ROI extent.
    tm = min(block_m, _round_up(pl.cdiv(n, 2), 16), _round_up(n, 8))
    tm = max(tm, 8)
    while True:
        mc = 128 if (tm % 128 == 0 and tm > 128) else tm
        streamed = 2 * tm * (f_img + f_clin) * 4 + 2 * tm * r * out_bytes
        temps = 4 * mc * r * 4 + mc * f_img * 2          # h (f32), casts, y
        need = resident_bytes + streamed + temps + (2 << 20)
        if need <= vmem_cap or tm <= 16:
            return tm, mc, need
        tm = max(16, _round_up(tm // 2, 16))


def two_mlp_head_pallas(x_img, clinical, w6_img_t, w6_clin_t, b6, w7_t, b7,
                        *, block_m=256, out_dtype=jnp.bfloat16):
    """x_img: (N, F_img) f32; clinical: (N, F_clin) f32 or None;
    w6_img_t: (F_img, R) bf16; w6_clin_t: (F_clin, R) bf16 or None;
    b6/b7: (1, R) f32; w7_t: (R, R) bf16.  Returns (N, R) out_dtype."""
    n, f_img = x_img.shape
    fw, r = w6_img_t.shape
    assert fw == f_img and w7_t.shape == (r, r)
    has_clin = clinical is not None
    f_clin = clinical.shape[1] if has_clin else 0
    if has_clin:
        assert w6_clin_t is not None and w6_clin_t.shape == (f_clin, r)

    out_bytes = jnp.dtype(out_dtype).itemsize
    resident_bytes = ((w6_img_t.size + (w6_clin_t.size if has_clin else 0)
                       + w7_t.size) * 2 + (b6.size + b7.size) * 4)

    # Generation-aware VMEM cap (leave headroom for Mosaic internals).
    try:
        vmem_cap = int(pltpu.get_tpu_info().vmem_capacity_bytes * 0.85)
    except Exception:
        vmem_cap = 48 << 20   # conservative (fits v7x's 64 MiB per-TC VMEM)

    tm, mc, need = _plan_tiles(n, f_img, f_clin, r, resident_bytes, out_bytes,
                               block_m, vmem_cap)
    n_chunks = tm // mc
    grid = (pl.cdiv(n, tm),)
    vmem_limit = int(min(max(need, 32 << 20), vmem_cap))

    kernel = _make_two_mlp_head_kernel(mc, n_chunks, has_clin)

    in_specs = [pl.BlockSpec((tm, f_img), lambda i: (i, 0))]       # x_img streamed
    args = [x_img]
    if has_clin:
        in_specs.append(pl.BlockSpec((tm, f_clin), lambda i: (i, 0)))   # clinical streamed
        args.append(clinical)
    in_specs.append(_resident_spec((f_img, r))); args.append(w6_img_t)  # W6 (img rows)
    if has_clin:
        in_specs.append(_resident_spec((f_clin, r))); args.append(w6_clin_t)  # W6 (clin rows)
    in_specs.append(_resident_spec((1, r))); args.append(b6)
    in_specs.append(_resident_spec((r, r))); args.append(w7_t)
    in_specs.append(_resident_spec((1, r))); args.append(b7)

    cost = pl.CostEstimate(
        flops=2 * n * (f_img + f_clin) * r + 2 * n * r * r,
        transcendentals=0,
        bytes_accessed=(x_img.size * 4 + (clinical.size * 4 if has_clin else 0)
                        + resident_bytes + n * r * out_bytes),
    )

    return pl.pallas_call(
        kernel,
        out_shape=jax.ShapeDtypeStruct((n, r), out_dtype),
        grid=grid,
        in_specs=in_specs,
        out_specs=pl.BlockSpec((tm, r), lambda i: (i, 0)),
        compiler_params=pltpu.CompilerParams(
            dimension_semantics=("parallel",),
            vmem_limit_bytes=vmem_limit,
        ),
        cost_estimate=cost,
    )(*args)


# ------------------------------- Module glue --------------------------------

class Setup:
    # Mirrors the relevant ModelSetup fields.
    add_clinical_to_roi_heads = True
    clinical_input_channels = 32


def init_params(key, in_features_total, representation_size):
    """Deterministic synthetic init in PyTorch Linear layout: W is (out, in)."""
    k6w, k6b, k7w, k7b = jax.random.split(key, 4)
    r = representation_size
    return {
        "w6": jax.random.normal(k6w, (r, in_features_total), jnp.float32) * 0.02,
        "b6": jax.random.normal(k6b, (r,), jnp.float32) * 0.02,
        "w7": jax.random.normal(k7w, (r, r), jnp.float32) * 0.02,
        "b7": jax.random.normal(k7b, (r,), jnp.float32) * 0.02,
    }


def pack_params(params, f_img, add_clinical):
    """PyTorch (out, in) f32 -> kernel layout: W6 split into the image-feature
    and clinical-feature row slabs (so no activation concat is needed),
    transposed bf16 weights, f32 (1, R) biases.  No zero-padding required."""
    r = params["w6"].shape[0]
    w6 = params["w6"]
    return {
        "w6_img_t": jnp.asarray(w6[:, :f_img].T, jnp.bfloat16),
        "w6_clin_t": (jnp.asarray(w6[:, f_img:].T, jnp.bfloat16)
                      if add_clinical else None),
        "b6": params["b6"].reshape(1, r).astype(jnp.float32),
        "w7_t": params["w7"].T.astype(jnp.bfloat16),
        "b7": params["b7"].reshape(1, r).astype(jnp.float32),
    }


def xami_two_mlp_head_forward(setup, packed, x_nchw, clinical_input=None,
                              out_dtype=jnp.bfloat16):
    """Matches XAMITwoMLPHead.forward; flatten is a free reshape and the concat
    is folded into the kernel as a second matmul operand."""
    n = x_nchw.shape[0]
    x = x_nchw.reshape(n, -1).astype(jnp.float32)     # flatten(start_dim=1)
    clin = None
    if setup.add_clinical_to_roi_heads:
        assert clinical_input is not None, (
            "clinical input required when add_clinical_to_roi_heads is set")
        clin = clinical_input.astype(jnp.float32)
    return two_mlp_head_pallas(
        x, clin, packed["w6_img_t"], packed["w6_clin_t"],
        packed["b6"], packed["w7_t"], packed["b7"], out_dtype=out_dtype)


# ---------------------------------- main -------------------------------------

if __name__ == "__main__":
    setup = Setup()

    # Small, module-consistent shapes: ROI-pooled features (N, C, H, W) = (8, 4, 7, 7)
    N, C, H, W = 8, 4, 7, 7
    representation_size = 128
    f_img = C * H * W                                   # 196
    in_features_total = f_img + (
        setup.clinical_input_channels if setup.add_clinical_to_roi_heads else 0)

    key = jax.random.PRNGKey(0)
    kx, kc, kp = jax.random.split(key, 3)
    x = jax.random.normal(kx, (N, C, H, W), jnp.float32)
    clinical = jax.random.normal(kc, (N, setup.clinical_input_channels), jnp.float32)
    params = init_params(kp, in_features_total, representation_size)
    packed = pack_params(params, f_img, setup.add_clinical_to_roi_heads)

    out = xami_two_mlp_head_forward(setup, packed, x, clinical)
    jax.block_until_ready(out)

    # Pure-JAX reference with the same bf16-quantized operands + f32 accumulation.
    xq = x.reshape(N, -1).astype(jnp.bfloat16).astype(jnp.float32)
    cq = clinical.astype(jnp.bfloat16).astype(jnp.float32)
    w6i = packed["w6_img_t"].astype(jnp.float32)
    w6c = packed["w6_clin_t"].astype(jnp.float32)
    h = jnp.maximum(xq @ w6i + cq @ w6c + packed["b6"], 0.0)
    hq = h.astype(jnp.bfloat16).astype(jnp.float32)
    ref = jnp.maximum(hq @ packed["w7_t"].astype(jnp.float32) + packed["b7"], 0.0)

    assert out.shape == (N, representation_size)
    assert jnp.allclose(out.astype(jnp.float32), ref, atol=1e-2, rtol=2e-2)

    print("KERNEL_OK")
</pallas_src>

<mosaic_0001>
module attributes {stable_mosaic.version = 11 : i64} {
  func.func @kernel(%arg0: i32, %arg1: memref<8x196xf32, #tpu.memory_space<vmem>>, %arg2: memref<8x32xf32, #tpu.memory_space<vmem>>, %arg3: memref<196x128xbf16, #tpu.memory_space<vmem>>, %arg4: memref<32x128xbf16, #tpu.memory_space<vmem>>, %arg5: memref<1x128xf32, #tpu.memory_space<vmem>>, %arg6: memref<128x128xbf16, #tpu.memory_space<vmem>>, %arg7: memref<1x128xf32, #tpu.memory_space<vmem>>, %arg8: memref<8x128xbf16, #tpu.memory_space<vmem>>) attributes {dimension_semantics = [#tpu.dimension_semantics<parallel>], iteration_bounds = array<i64: 1>, scalar_prefetch = 0 : i64, scratch_operands = 0 : i64, tpu.core_type = #tpu.core_type<tc>, window_params = [{transform_indices = @transform_0, window_bounds = array<i64: 8, 196>}, {transform_indices = @transform_1, window_bounds = array<i64: 8, 32>}, {pipeline_mode = #tpu.pipeline_mode<synchronous>, transform_indices = @transform_2, window_bounds = array<i64: 196, 128>}, {pipeline_mode = #tpu.pipeline_mode<synchronous>, transform_indices = @transform_3, window_bounds = array<i64: 32, 128>}, {pipeline_mode = #tpu.pipeline_mode<synchronous>, transform_indices = @transform_4, window_bounds = array<i64: 1, 128>}, {pipeline_mode = #tpu.pipeline_mode<synchronous>, transform_indices = @transform_5, window_bounds = array<i64: 128, 128>}, {pipeline_mode = #tpu.pipeline_mode<synchronous>, transform_indices = @transform_6, window_bounds = array<i64: 1, 128>}, {transform_indices = @transform_7, window_bounds = array<i64: 8, 128>}]} {
    %c0 = arith.constant 0 : index
    %c0_0 = arith.constant 0 : index
    %0 = vector.load %arg1[%c0, %c0_0] : memref<8x196xf32, #tpu.memory_space<vmem>>, vector<8x196xf32>
    %1 = arith.truncf %0 : vector<8x196xf32> to vector<8x196xbf16>
    %c0_1 = arith.constant 0 : index
    %c0_2 = arith.constant 0 : index
    %2 = vector.load %arg3[%c0_1, %c0_2] : memref<196x128xbf16, #tpu.memory_space<vmem>>, vector<196x128xbf16>
    %cst = arith.constant dense<0.000000e+00> : vector<8x128xf32>
    %3 = tpu.matmul %1, %2, %cst {dimension_numbers = #tpu.dot_dimension_numbers<[1], [0], [0], [1], [0, 0, 1, 1], [], []>} : vector<8x196xbf16>, vector<196x128xbf16>, vector<8x128xf32> -> vector<8x128xf32>
    %c0_3 = arith.constant 0 : index
    %c0_4 = arith.constant 0 : index
    %4 = vector.load %arg2[%c0_3, %c0_4] : memref<8x32xf32, #tpu.memory_space<vmem>>, vector<8x32xf32>
    %5 = arith.truncf %4 : vector<8x32xf32> to vector<8x32xbf16>
    %c0_5 = arith.constant 0 : index
    %c0_6 = arith.constant 0 : index
    %6 = vector.load %arg4[%c0_5, %c0_6] : memref<32x128xbf16, #tpu.memory_space<vmem>>, vector<32x128xbf16>
    %cst_7 = arith.constant dense<0.000000e+00> : vector<8x128xf32>
    %7 = tpu.matmul %5, %6, %cst_7 {dimension_numbers = #tpu.dot_dimension_numbers<[1], [0], [0], [1], [0, 0, 1, 1], [], []>} : vector<8x32xbf16>, vector<32x128xbf16>, vector<8x128xf32> -> vector<8x128xf32>
    %8 = arith.addf %3, %7 : vector<8x128xf32>
    %c0_8 = arith.constant 0 : index
    %c0_9 = arith.constant 0 : index
    %9 = vector.load %arg5[%c0_8, %c0_9] : memref<1x128xf32, #tpu.memory_space<vmem>>, vector<1x128xf32>
    %10 = vector.broadcast %9 : vector<1x128xf32> to vector<8x128xf32>
    %11 = arith.addf %8, %10 : vector<8x128xf32>
    %cst_10 = arith.constant 0.000000e+00 : f32
    %12 = vector.broadcast %cst_10 : f32 to vector<8x128xf32>
    %13 = arith.maximumf %11, %12 : vector<8x128xf32>
    %14 = arith.truncf %13 : vector<8x128xf32> to vector<8x128xbf16>
    %c0_11 = arith.constant 0 : index
    %c0_12 = arith.constant 0 : index
    %15 = vector.load %arg6[%c0_11, %c0_12] : memref<128x128xbf16, #tpu.memory_space<vmem>>, vector<128x128xbf16>
    %cst_13 = arith.constant dense<0.000000e+00> : vector<8x128xf32>
    %16 = tpu.matmul %14, %15, %cst_13 {dimension_numbers = #tpu.dot_dimension_numbers<[1], [0], [0], [1], [0, 0, 1, 1], [], []>} : vector<8x128xbf16>, vector<128x128xbf16>, vector<8x128xf32> -> vector<8x128xf32>
    %c0_14 = arith.constant 0 : index
    %c0_15 = arith.constant 0 : index
    %17 = vector.load %arg7[%c0_14, %c0_15] : memref<1x128xf32, #tpu.memory_space<vmem>>, vector<1x128xf32>
    %18 = vector.broadcast %17 : vector<1x128xf32> to vector<8x128xf32>
    %19 = arith.addf %16, %18 : vector<8x128xf32>
    %cst_16 = arith.constant 0.000000e+00 : f32
    %20 = vector.broadcast %cst_16 : f32 to vector<8x128xf32>
    %21 = arith.maximumf %19, %20 : vector<8x128xf32>
    %22 = arith.truncf %21 : vector<8x128xf32> to vector<8x128xbf16>
    %c0_17 = arith.constant 0 : index
    %c0_18 = arith.constant 0 : index
    %23 = vector.load %arg8[%c0_17, %c0_18] : memref<8x128xbf16, #tpu.memory_space<vmem>>, vector<8x128xbf16>
    tpu.vector_store %arg8[%c0_17, %c0_18], %22 {strides = array<i32>} : memref<8x128xbf16, #tpu.memory_space<vmem>>, vector<8x128xbf16>,
    return
  }
  func.func @transform_0(%arg0: i32) -> (i32, i32) {
    %c0_i32 = arith.constant 0 : i32
    %c0_i32_0 = arith.constant 0 : i32
    return %arg0, %c0_i32 : i32, i32
  }
  func.func @transform_1(%arg0: i32) -> (i32, i32) {
    %c0_i32 = arith.constant 0 : i32
    %c0_i32_0 = arith.constant 0 : i32
    return %arg0, %c0_i32 : i32, i32
  }
  func.func @transform_2(%arg0: i32) -> (i32, i32) {
    %c0_i32 = arith.constant 0 : i32
    %c0_i32_0 = arith.constant 0 : i32
    %c0_i32_1 = arith.constant 0 : i32
    return %c0_i32, %c0_i32_0 : i32, i32
  }
  func.func @transform_3(%arg0: i32) -> (i32, i32) {
    %c0_i32 = arith.constant 0 : i32
    %c0_i32_0 = arith.constant 0 : i32
    %c0_i32_1 = arith.constant 0 : i32
    return %c0_i32, %c0_i32_0 : i32, i32
  }
  func.func @transform_4(%arg0: i32) -> (i32, i32) {
    %c0_i32 = arith.constant 0 : i32
    %c0_i32_0 = arith.constant 0 : i32
    %c0_i32_1 = arith.constant 0 : i32
    return %c0_i32, %c0_i32_0 : i32, i32
  }
  func.func @transform_5(%arg0: i32) -> (i32, i32) {
    %c0_i32 = arith.constant 0 : i32
    %c0_i32_0 = arith.constant 0 : i32
    %c0_i32_1 = arith.constant 0 : i32
    return %c0_i32, %c0_i32_0 : i32, i32
  }
  func.func @transform_6(%arg0: i32) -> (i32, i32) {
    %c0_i32 = arith.constant 0 : i32
    %c0_i32_0 = arith.constant 0 : i32
    %c0_i32_1 = arith.constant 0 : i32
    return %c0_i32, %c0_i32_0 : i32, i32
  }
  func.func @transform_7(%arg0: i32) -> (i32, i32) {
    %c0_i32 = arith.constant 0 : i32
    %c0_i32_0 = arith.constant 0 : i32
    return %arg0, %c0_i32 : i32, i32
  }
}

</mosaic_0001>

<llo_original>
// kernel: tpu_custom_call.1
$region0: #{tpu_custom_call.1}
  #allocation0 [shape = 'u32[]', space=smem, size = 0x4, offset = 0x4, fixed_abs, tag = 'smem constant byte address 0x4 - core index']
  #allocation1 [shape = 'u32[144,128]{1,0:T(1,128)}', space=vmem, size = 0x12000, scoped, tag = 'internal scratch']
  %s0 = inlined_call_operand.hbm [shape: f32[8,196], index: 0, kind: input, shape index: {}]
  %s1 = inlined_call_operand.hbm [shape: f32[8,32], index: 1, kind: input, shape index: {}]
  %s2 = inlined_call_operand.hbm [shape: bf16[196,128], index: 2, kind: input, shape index: {}]
  %s3 = inlined_call_operand.hbm [shape: bf16[32,128], index: 3, kind: input, shape index: {}]
  %s4 = inlined_call_operand.vmem [shape: f32[1,128], index: 4, kind: input, shape index: {}]
  %s5 = inlined_call_operand.hbm [shape: bf16[128,128], index: 5, kind: input, shape index: {}]
  %s6 = inlined_call_operand.vmem [shape: f32[1,128], index: 6, kind: input, shape index: {}]
  %s7 = inlined_call_operand.hbm [shape: bf16[8,128], index: 7, kind: output, shape index: {}]
  %s8 = sld [smem:[#allocation0]]
  $region58: #{tpu_custom_call.1} parent=0
    _
  %s10 = ssub.s32 1, %s8
  %s11 = scalar_select 0, %s10, %s8
  $region1: #{tpu_custom_call.1} parent=0
    #allocation2 [shape = 'u8[8192]{0}', space=vmem, size = 0x2000, scoped, tag = 'input window, operand 0, single buffered']
    #allocation3 [shape = 's32[1]{0}', space=sflag, size = 0x4, scoped, tag = 'scoped memory for tpu_custom_call.1']
    #allocation4 [shape = 's32[1]{0}', space=sflag, size = 0x4, scoped, tag = 'scoped memory for tpu_custom_call.1']
    #allocation5 [shape = 'u8[4096]{0}', space=vmem, size = 0x1000, scoped, tag = 'input window, operand 1, single buffered']
    #allocation6 [shape = 's32[1]{0}', space=sflag, size = 0x4, scoped, tag = 'scoped memory for tpu_custom_call.1']
    #allocation7 [shape = 'u8[51200]{0}', space=vmem, size = 0xc800, scoped, tag = 'input window, operand 2, single buffered']
    #allocation8 [shape = 'u8[8192]{0}', space=vmem, size = 0x2000, scoped, tag = 'input window, operand 3, single buffered']
    #allocation9 [shape = 's32[1]{0}', space=sflag, size = 0x4, scoped, tag = 'scoped memory for tpu_custom_call.1']
    #allocation10 [shape = 'u8[32768]{0}', space=vmem, size = 0x8000, scoped, tag = 'input window, operand 5, single buffered']
    #allocation11 [shape = 'u8[2048]{0}', space=vmem, size = 0x800, scoped, tag = 'output window, operand 0, single buffered']
    %12 = vsyncpa [#allocation3], 0
    %13 = vsyncpa [#allocation6], 0
    %14 = vsyncpa [#allocation9], 0
    %15 = vsyncpa [#allocation4], 0
    // Predicated region
    $region2: #{tpu_custom_call.1} parent=1 // pred_check
      _
    $region3: #{tpu_custom_call.1} parent=1 // pred_check_branch
      %17 = sbr.rel (0) target = $region5
    $region4: #{tpu_custom_call.1} parent=1 // pred_region
      %s19 = ssub.s32 256, 256
      %20 = vsyncadd [#allocation3], %s19
      %s22 = sshll.u32 [#allocation2], 4
      %s23 = int_to_ptr.vmem [resolvable:$true] %s22
      %25 = dma.hbm_to_vmem [thread:$0]  %s0, 256, %s23, [#allocation3]
    $region5: #{tpu_custom_call.1} parent=1 // pred_fallthru
      _
    // Predicated region
    $region6: #{tpu_custom_call.1} parent=1 // pred_check
      _
    $region7: #{tpu_custom_call.1} parent=1 // pred_check_branch
      %27 = sbr.rel (0) target = $region9
    $region8: #{tpu_custom_call.1} parent=1 // pred_region
      %s29 = ssub.s32 128, 128
      %30 = vsyncadd [#allocation6], %s29
      %s32 = sshll.u32 [#allocation5], 4
      %s33 = int_to_ptr.vmem [resolvable:$true] %s32
      %35 = dma.hbm_to_vmem [thread:$0]  %s1, 128, %s33, [#allocation6]
    $region9: #{tpu_custom_call.1} parent=1 // pred_fallthru
      _
    // Predicated region
    $region10: #{tpu_custom_call.1} parent=1 // pred_check
      _
    $region11: #{tpu_custom_call.1} parent=1 // pred_check_branch
      %37 = sbr.rel (0) target = $region13
    $region12: #{tpu_custom_call.1} parent=1 // pred_region
      %s39 = ssub.s32 1600, 1600
      %40 = vsyncadd [#allocation6], %s39
      %s41 = sshll.u32 [#allocation7], 4
      %s42 = int_to_ptr.vmem [resolvable:$true] %s41
      %47 = dma.hbm_to_vmem [thread:$0]  %s2, 1600, %s42, [#allocation6], 64, 64, 4
    $region13: #{tpu_custom_call.1} parent=1 // pred_fallthru
      _
    // Predicated region
    $region14: #{tpu_custom_call.1} parent=1 // pred_check
      _
    $region15: #{tpu_custom_call.1} parent=1 // pred_check_branch
      %49 = sbr.rel (0) target = $region17
    $region16: #{tpu_custom_call.1} parent=1 // pred_region
      %s51 = ssub.s32 256, 256
      %52 = vsyncadd [#allocation9], %s51
      %s53 = sshll.u32 [#allocation8], 4
      %s54 = int_to_ptr.vmem [resolvable:$true] %s53
      %59 = dma.hbm_to_vmem [thread:$0]  %s3, 256, %s54, [#allocation9], 64, 64, 4
    $region17: #{tpu_custom_call.1} parent=1 // pred_fallthru
      _
    // Predicated region
    $region18: #{tpu_custom_call.1} parent=1 // pred_check
      _
    $region19: #{tpu_custom_call.1} parent=1 // pred_check_branch
      %61 = sbr.rel (0) target = $region21
    $region20: #{tpu_custom_call.1} parent=1 // pred_region
      _
    $region21: #{tpu_custom_call.1} parent=1 // pred_fallthru
      _
    // Predicated region
    $region22: #{tpu_custom_call.1} parent=1 // pred_check
      _
    $region23: #{tpu_custom_call.1} parent=1 // pred_check_branch
      %63 = sbr.rel (0) target = $region25
    $region24: #{tpu_custom_call.1} parent=1 // pred_region
      %s65 = ssub.s32 1024, 1024
      %66 = vsyncadd [#allocation9], %s65
      %s67 = sshll.u32 [#allocation10], 4
      %s68 = int_to_ptr.vmem [resolvable:$true] %s67
      %73 = dma.hbm_to_vmem [thread:$0]  %s5, 1024, %s68, [#allocation9], 64, 64, 4
    $region25: #{tpu_custom_call.1} parent=1 // pred_fallthru
      _
    // Predicated region
    $region26: #{tpu_custom_call.1} parent=1 // pred_check
      _
    $region27: #{tpu_custom_call.1} parent=1 // pred_check_branch
      %75 = sbr.rel (0) target = $region29
    $region28: #{tpu_custom_call.1} parent=1 // pred_region
      _
    $region29: #{tpu_custom_call.1} parent=1 // pred_fallthru
      _
    // Predicated region
    $region30: #{tpu_custom_call.1} parent=1 // pred_check
      _
    $region31: #{tpu_custom_call.1} parent=1 // pred_check_branch
      %77 = sbr.rel (0) target = $region33
    $region32: #{tpu_custom_call.1} parent=1 // pred_region
      %78 = dma.done [#allocation3], 256
    $region33: #{tpu_custom_call.1} parent=1 // pred_fallthru
      _
    // Predicated region
    $region34: #{tpu_custom_call.1} parent=1 // pred_check
      _
    $region35: #{tpu_custom_call.1} parent=1 // pred_check_branch
      %80 = sbr.rel (0) target = $region37
    $region36: #{tpu_custom_call.1} parent=1 // pred_region
      %81 = dma.done [#allocation6], 128
    $region37: #{tpu_custom_call.1} parent=1 // pred_fallthru
      _
    // Predicated region
    $region38: #{tpu_custom_call.1} parent=1 // pred_check
      _
    $region39: #{tpu_custom_call.1} parent=1 // pred_check_branch
      %83 = sbr.rel (0) target = $region41
    $region40: #{tpu_custom_call.1} parent=1 // pred_region
      %84 = dma.done [#allocation6], 1600
    $region41: #{tpu_custom_call.1} parent=1 // pred_fallthru
      _
    // Predicated region
    $region42: #{tpu_custom_call.1} parent=1 // pred_check
      _
    $region43: #{tpu_custom_call.1} parent=1 // pred_check_branch
      %86 = sbr.rel (0) target = $region45
    $region44: #{tpu_custom_call.1} parent=1 // pred_region
      %87 = dma.done [#allocation9], 256
    $region45: #{tpu_custom_call.1} parent=1 // pred_fallthru
      _
    // Predicated region
    $region46: #{tpu_custom_call.1} parent=1 // pred_check
      _
    $region47: #{tpu_custom_call.1} parent=1 // pred_check_branch
      %89 = sbr.rel (0) target = $region49
    $region48: #{tpu_custom_call.1} parent=1 // pred_region
      %90 = dma.done [#allocation9], 1024
    $region49: #{tpu_custom_call.1} parent=1 // pred_fallthru
      _
    %v92 = vld [vmem:[#allocation2] sm:$0xff]
    %v93 = vld [vmem:[#allocation2 + $0x8] sm:$0xff]
    %v94 = vpack.c.bf16 %v92, %v92
    %v95 = vpack.c.bf16 %v93, %v93
    %v96 = vld [vmem:[#allocation7] sm:$0xf]
    %v97 = vld [vmem:[#allocation7 + $0x4] sm:$0xf]
    %v98 = vld [vmem:[#allocation7 + $0x8] sm:$0xf]
    %v99 = vld [vmem:[#allocation7 + $0xc] sm:$0xf]
    %v100 = vld [vmem:[#allocation7 + $0x10] sm:$0xf]
    %v101 = vld [vmem:[#allocation7 + $0x14] sm:$0xf]
    %v102 = vld [vmem:[#allocation7 + $0x18] sm:$0xf]
    %v103 = vld [vmem:[#allocation7 + $0x1c] sm:$0xf]
    %v104 = vld [vmem:[#allocation7 + $0x20] sm:$0xf]
    %v105 = vld [vmem:[#allocation7 + $0x24] sm:$0xf]
    %v106 = vld [vmem:[#allocation7 + $0x28] sm:$0xf]
    %v107 = vld [vmem:[#allocation7 + $0x2c] sm:$0xf]
    %v108 = vld [vmem:[#allocation7 + $0x30] sm:$0xf]
    %v109 = vld [vmem:[#allocation7 + $0x34] sm:$0xf]
    %v110 = vld [vmem:[#allocation7 + $0x38] sm:$0xf]
    %v111 = vld [vmem:[#allocation7 + $0x3c] sm:$0xf]
    %v112 = vld [vmem:[#allocation7 + $0x40] sm:$0xf]
    %v113 = vld [vmem:[#allocation7 + $0x44] sm:$0xf]
    %v114 = vld [vmem:[#allocation7 + $0x48] sm:$0xf]
    %v115 = vld [vmem:[#allocation7 + $0x4c] sm:$0xf]
    %v116 = vld [vmem:[#allocation7 + $0x50] sm:$0xf]
    %v117 = vld [vmem:[#allocation7 + $0x54] sm:$0xf]
    %v118 = vld [vmem:[#allocation7 + $0x58] sm:$0xf]
    %v119 = vld [vmem:[#allocation7 + $0x5c] sm:$0xf]
    %v120 = vld [vmem:[#allocation7 + $0x60] sm:$0x3]
    %v121 = vld [vmem:[#allocation5] sm:$0xff]
    %v122 = vpack.c.bf16 %v121, %v121
    %v123 = vld [vmem:[#allocation8] sm:$0xf]
    %v124 = vld [vmem:[#allocation8 + $0x4] sm:$0xf]
    %v125 = vld [vmem:[#allocation8 + $0x8] sm:$0xf]
    %v126 = vld [vmem:[#allocation8 + $0xc] sm:$0xf]
    %v131 = vunpack.c.l.b16 %v123
    %v132 = vunpack.c.l.b16 %v124
    %v133 = vunpack.c.l.b16 %v125
    %v134 = vunpack.c.l.b16 %v126
    %v135 = vpack.c.b16 %v132, %v131
    %v136 = vpack.c.b16 %v134, %v133
    %vm139 = vcmask 261120
    %v141 = vsel %vm139, %v122, 0
    %143 = vmatprep.subr.bf16.mxu0 0
    %144 = vmatpush1.bf16.msra.mxu0 %v135
    %145 = vmatprep.subr.bf16.mxu0 0
    %146 = vmatpush1.bf16.msra.mxu0 %v136
    %147 = vmatprep.subr.bf16.mxu0 0
    %148 = vmatpush1.bf16.msra.mxu0 0
    %149 = vmatprep.subr.bf16.mxu0 0
    %150 = vmatpush1.bf16.msra.mxu0 0
    %151 = vmatprep.subr.bf16.mxu0 0
    %152 = vmatpush1.bf16.msra.mxu0 0
    %153 = vmatprep.subr.bf16.mxu0 0
    %154 = vmatpush1.bf16.msra.mxu0 0
    %155 = vmatprep.subr.bf16.mxu0 0
    %156 = vmatpush1.bf16.msra.mxu0 0
    %157 = vmatprep.subr.bf16.mxu0 0
    %158 = vmatpush1.bf16.msra.mxu0 0
    %159 = vmatprep.subr.bf16.mxu0 0
    %160 = vmatpush1.bf16.msra.mxu0 0
    %161 = vmatprep.subr.bf16.mxu0 0
    %162 = vmatpush1.bf16.msra.mxu0 0
    %163 = vmatprep.subr.bf16.mxu0 0
    %164 = vmatpush1.bf16.msra.mxu0 0
    %165 = vmatprep.subr.bf16.mxu0 0
    %166 = vmatpush1.bf16.msra.mxu0 0
    %167 = vmatprep.subr.bf16.mxu0 0
    %168 = vmatpush1.bf16.msra.mxu0 0
    %169 = vmatprep.subr.bf16.mxu0 0
    %170 = vmatpush1.bf16.msra.mxu0 0
    %171 = vmatprep.subr.bf16.mxu0 0
    %172 = vmatpush1.bf16.msra.mxu0 0
    %173 = vmatprep.subr.bf16.mxu0 0
    %174 = vmatpush1.bf16.msra.mxu0 0
    %175 = vmatprep.mubr.bf16.mxu0 0
    %176 = vmatmul.mubr.bf16.gmra.mrb[0].mxu0 %v141
    %v177 = vpop.f32.mrb[0].mxu0
    %v178 = vadd.f32 0.0, %v177
    %v179 = vpop.f32.mrb[0].mxu0
    %v180 = vpop.f32.mrb[0].mxu0
    %v181 = vpop.f32.mrb[0].mxu0
    %182 = vdwg.mxu0
    %v208 = vunpack.c.l.b16 %v96
    %v209 = vunpack.c.l.b16 %v97
    %v210 = vunpack.c.l.b16 %v98
    %v211 = vunpack.c.l.b16 %v99
    %v212 = vunpack.c.l.b16 %v100
    %v213 = vunpack.c.l.b16 %v101
    %v214 = vunpack.c.l.b16 %v102
    %v215 = vunpack.c.l.b16 %v103
    %v216 = vunpack.c.l.b16 %v104
    %v217 = vunpack.c.l.b16 %v105
    %v218 = vunpack.c.l.b16 %v106
    %v219 = vunpack.c.l.b16 %v107
    %v220 = vunpack.c.l.b16 %v108
    %v221 = vunpack.c.l.b16 %v109
    %v222 = vunpack.c.l.b16 %v110
    %v223 = vunpack.c.l.b16 %v111
    %v224 = vunpack.c.l.b16 %v112
    %v225 = vunpack.c.l.b16 %v113
    %v226 = vunpack.c.l.b16 %v114
    %v227 = vunpack.c.l.b16 %v115
    %v228 = vunpack.c.l.b16 %v116
    %v229 = vunpack.c.l.b16 %v117
    %v230 = vunpack.c.l.b16 %v118
    %v231 = vunpack.c.l.b16 %v119
    %v232 = vunpack.c.l.b16 %v120
    %v233 = vpack.c.b16 %v209, %v208
    %v234 = vpack.c.b16 %v211, %v210
    %v235 = vpack.c.b16 %v213, %v212
    %v236 = vpack.c.b16 %v215, %v214
    %v237 = vpack.c.b16 %v217, %v216
    %v238 = vpack.c.b16 %v219, %v218
    %v239 = vpack.c.b16 %v221, %v220
    %v240 = vpack.c.b16 %v223, %v222
    %v241 = vpack.c.b16 %v225, %v224
    %v242 = vpack.c.b16 %v227, %v226
    %v243 = vpack.c.b16 %v229, %v228
    %v244 = vpack.c.b16 %v231, %v230
    %v245 = vpack.c.b16 %v232, %v232
    %vm258 = vcmask 556032
    %v260 = vsel %vm258, %v95, 0
    %vm262 = vcmask 1041408
    %v264 = vsel %vm262, %v245, 0
    %266 = vmatprep.subr.bf16.mxu0 0
    %267 = vmatpush1.bf16.msra.mxu0 %v233
    %268 = vmatprep.subr.bf16.mxu0 0
    %269 = vmatpush1.bf16.msra.mxu0 %v234
    %270 = vmatprep.subr.bf16.mxu0 0
    %271 = vmatpush1.bf16.msra.mxu0 %v235
    %272 = vmatprep.subr.bf16.mxu0 0
    %273 = vmatpush1.bf16.msra.mxu0 %v236
    %274 = vmatprep.subr.bf16.mxu0 0
    %275 = vmatpush1.bf16.msra.mxu0 %v237
    %276 = vmatprep.subr.bf16.mxu0 0
    %277 = vmatpush1.bf16.msra.mxu0 %v238
    %278 = vmatprep.subr.bf16.mxu0 0
    %279 = vmatpush1.bf16.msra.mxu0 %v239
    %280 = vmatprep.subr.bf16.mxu0 0
    %281 = vmatpush1.bf16.msra.mxu0 %v240
    %282 = vmatprep.subr.bf16.mxu0 0
    %283 = vmatpush1.bf16.msra.mxu0 %v241
    %284 = vmatprep.subr.bf16.mxu0 0
    %285 = vmatpush1.bf16.msra.mxu0 %v242
    %286 = vmatprep.subr.bf16.mxu0 0
    %287 = vmatpush1.bf16.msra.mxu0 %v243
    %288 = vmatprep.subr.bf16.mxu0 0
    %289 = vmatpush1.bf16.msra.mxu0 %v244
    %290 = vmatprep.subr.bf16.mxu0 0
    %291 = vmatpush1.bf16.msra.mxu0 %v264
    %292 = vmatprep.subr.bf16.mxu0 0
    %293 = vmatpush1.bf16.msra.mxu0 0
    %294 = vmatprep.subr.bf16.mxu0 0
    %295 = vmatpush1.bf16.msra.mxu0 0
    %296 = vmatprep.subr.bf16.mxu0 0
    %297 = vmatpush1.bf16.msra.mxu0 0
    %298 = vmatprep.mubr.bf16.mxu0 %v260
    %299 = vmatmul.mubr.bf16.gmra.mrb[0].mxu0 %v94
    %v300 = vpop.f32.mrb[0].mxu0
    %v301 = vadd.f32 %v178, %v300
    %v302 = vpop.f32.mrb[0].mxu0
    %v303 = vpop.f32.mrb[0].mxu0
    %v304 = vpop.f32.mrb[0].mxu0
    %305 = vdwg.mxu0
    %v306 = vld [vmem:[%s4] sm:$0x1]
    %v308 = vlaneseq
    %v309 = vshrl.u32 %v308, 7
    %v310 = vsub.s32 0, %v309
    %v311 = vrot.slane %v306, %v310
    %v313 = vadd.f32 %v301, %v311
    %v314 = vmax.f32 %v313, 0.0
    %v315 = vpack.c.bf16 %v314, %v314
    %v316 = vld [vmem:[#allocation10] sm:$0xf]
    %v317 = vld [vmem:[#allocation10 + $0x4] sm:$0xf]
    %v318 = vld [vmem:[#allocation10 + $0x8] sm:$0xf]
    %v319 = vld [vmem:[#allocation10 + $0xc] sm:$0xf]
    %v320 = vld [vmem:[#allocation10 + $0x10] sm:$0xf]
    %v321 = vld [vmem:[#allocation10 + $0x14] sm:$0xf]
    %v322 = vld [vmem:[#allocation10 + $0x18] sm:$0xf]
    %v323 = vld [vmem:[#allocation10 + $0x1c] sm:$0xf]
    %v324 = vld [vmem:[#allocation10 + $0x20] sm:$0xf]
    %v325 = vld [vmem:[#allocation10 + $0x24] sm:$0xf]
    %v326 = vld [vmem:[#allocation10 + $0x28] sm:$0xf]
    %v327 = vld [vmem:[#allocation10 + $0x2c] sm:$0xf]
    %v328 = vld [vmem:[#allocation10 + $0x30] sm:$0xf]
    %v329 = vld [vmem:[#allocation10 + $0x34] sm:$0xf]
    %v330 = vld [vmem:[#allocation10 + $0x38] sm:$0xf]
    %v331 = vld [vmem:[#allocation10 + $0x3c] sm:$0xf]
    %v332 = vld [vmem:[%s6] sm:$0x1]
    %v334 = vlaneseq
    %v335 = vshrl.u32 %v334, 7
    %v336 = vsub.s32 0, %v335
    %v337 = vrot.slane %v332, %v336
    %v355 = vunpack.c.l.b16 %v316
    %v356 = vunpack.c.l.b16 %v317
    %v357 = vunpack.c.l.b16 %v318
    %v358 = vunpack.c.l.b16 %v319
    %v359 = vunpack.c.l.b16 %v320
    %v360 = vunpack.c.l.b16 %v321
    %v361 = vunpack.c.l.b16 %v322
    %v362 = vunpack.c.l.b16 %v323
    %v363 = vunpack.c.l.b16 %v324
    %v364 = vunpack.c.l.b16 %v325
    %v365 = vunpack.c.l.b16 %v326
    %v366 = vunpack.c.l.b16 %v327
    %v367 = vunpack.c.l.b16 %v328
    %v368 = vunpack.c.l.b16 %v329
    %v369 = vunpack.c.l.b16 %v330
    %v370 = vunpack.c.l.b16 %v331
    %v371 = vpack.c.b16 %v356, %v355
    %v372 = vpack.c.b16 %v358, %v357
    %v373 = vpack.c.b16 %v360, %v359
    %v374 = vpack.c.b16 %v362, %v361
    %v375 = vpack.c.b16 %v364, %v363
    %v376 = vpack.c.b16 %v366, %v365
    %v377 = vpack.c.b16 %v368, %v367
    %v378 = vpack.c.b16 %v370, %v369
    %387 = vmatprep.subr.bf16.mxu0 0
    %388 = vmatpush1.bf16.msra.mxu0 %v371
    %389 = vmatprep.subr.bf16.mxu0 0
    %390 = vmatpush1.bf16.msra.mxu0 %v372
    %391 = vmatprep.subr.bf16.mxu0 0
    %392 = vmatpush1.bf16.msra.mxu0 %v373
    %393 = vmatprep.subr.bf16.mxu0 0
    %394 = vmatpush1.bf16.msra.mxu0 %v374
    %395 = vmatprep.subr.bf16.mxu0 0
    %396 = vmatpush1.bf16.msra.mxu0 %v375
    %397 = vmatprep.subr.bf16.mxu0 0
    %398 = vmatpush1.bf16.msra.mxu0 %v376
    %399 = vmatprep.subr.bf16.mxu0 0
    %400 = vmatpush1.bf16.msra.mxu0 %v377
    %401 = vmatprep.subr.bf16.mxu0 0
    %402 = vmatpush1.bf16.msra.mxu0 %v378
    %403 = vmatprep.subr.bf16.mxu0 0
    %404 = vmatpush1.bf16.msra.mxu0 0
    %405 = vmatprep.subr.bf16.mxu0 0
    %406 = vmatpush1.bf16.msra.mxu0 0
    %407 = vmatprep.subr.bf16.mxu0 0
    %408 = vmatpush1.bf16.msra.mxu0 0
    %409 = vmatprep.subr.bf16.mxu0 0
    %410 = vmatpush1.bf16.msra.mxu0 0
    %411 = vmatprep.subr.bf16.mxu0 0
    %412 = vmatpush1.bf16.msra.mxu0 0
    %413 = vmatprep.subr.bf16.mxu0 0
    %414 = vmatpush1.bf16.msra.mxu0 0
    %415 = vmatprep.subr.bf16.mxu0 0
    %416 = vmatpush1.bf16.msra.mxu0 0
    %417 = vmatprep.subr.bf16.mxu0 0
    %418 = vmatpush1.bf16.msra.mxu0 0
    %419 = vmatprep.mubr.bf16.mxu0 0
    %420 = vmatmul.mubr.bf16.gmra.mrb[0].mxu0 %v315
    %v421 = vpop.f32.mrb[0].mxu0
    %v422 = vadd.f32 %v337, %v421
    %v423 = vpop.f32.mrb[0].mxu0
    %v424 = vpop.f32.mrb[0].mxu0
    %v425 = vpop.f32.mrb[0].mxu0
    %426 = vdwg.mxu0
    %v427 = vmax.f32 %v422, 0.0
    %v428 = vpack.c.bf16 %v427, %v427
    %429 = vst [vmem:[#allocation11] sm:$0xf] %v428
    // Predicated region
    $region50: #{tpu_custom_call.1} parent=1 // pred_check
      _
    $region51: #{tpu_custom_call.1} parent=1 // pred_check_branch
      %431 = sbr.rel (0) target = $region53
    $region52: #{tpu_custom_call.1} parent=1 // pred_region
      %s433 = ssub.s32 64, 64
      %434 = vsyncadd [#allocation4], %s433
      %s436 = sshll.u32 [#allocation11], 4
      %s437 = int_to_ptr.vmem [resolvable:$true] %s436
      %439 = dma.vmem_to_hbm [thread:$0]  %s437, 64, %s7, [#allocation4]
    $region53: #{tpu_custom_call.1} parent=1 // pred_fallthru
      _
    // Predicated region
    $region54: #{tpu_custom_call.1} parent=1 // pred_check
      _
    $region55: #{tpu_custom_call.1} parent=1 // pred_check_branch
      %441 = sbr.rel (0) target = $region57
    $region56: #{tpu_custom_call.1} parent=1 // pred_region
      %442 = dma.done [#allocation4], 64
    $region57: #{tpu_custom_call.1} parent=1 // pred_fallthru
      _
    %443 = vsyncpa [#allocation3], 1
    %444 = vsyncpa [#allocation6], 1
    %445 = vsyncpa [#allocation9], 1
    %446 = vsyncpa [#allocation4], 1

</llo_original>
